<compile_context>
chip_gen: v7x
topology: tpu7x:2x2x1
jax: 0.10.0
libtpu: 0.0.40
codegen_flags: <defaults>
</compile_context>

<pallas_src>
import math
import jax
import jax.numpy as jnp
from jax import lax
from jax.experimental import pallas as pl
from jax.experimental.pallas import tpu as pltpu


def _round_up(x, m):
    return (x + m - 1) // m * m


def _device_defaults():
    """Generation-aware (block_rows [logical rows], vmem_limit_bytes)."""
    try:
        kind = jax.devices()[0].device_kind.lower()
    except Exception:
        kind = ""
    if "v5 lite" in kind or "v5lite" in kind or "v5e" in kind:
        # 16 MiB scoped default / ~0.8 TB/s HBM: 8192 rows is near roofline.
        return 8192, 64 * 1024 * 1024
    if "v7" in kind:
        # 64 MiB physical VMEM: keep headroom; packed tiles stay small anyway.
        return 16384, 48 * 1024 * 1024
    # v6e / default.
    return 16384, 64 * 1024 * 1024


def _linear_kernel(x_ref, w_ref, b_ref, o_ref):
    # x: (tb, 128) packed rows, w: (128, 20) = diag(W^T, W^T),
    # b: (1, 20) f32, o: (tb, 20)
    acc = lax.dot_general(
        x_ref[...], w_ref[...],
        dimension_numbers=(((1,), (0,)), ((), ())),
        preferred_element_type=jnp.float32,
        precision=lax.Precision.HIGHEST,
    )
    o_ref[...] = (acc + b_ref[...]).astype(o_ref.dtype)


def mlp_out_linear(x, weight, bias, *, block_rows=None, vmem_limit_bytes=None):
    """Forward pass of MLP_OUT_LINEAR: x @ weight.T + bias.

    x:      (B, 64)   float32 (or bfloat16 for the opt-in low-precision path)
    weight: (10, 64)  float32 (PyTorch nn.Linear convention, NOT transposed)
    bias:   (10,)     float32
    returns (B, 10)   x.dtype
    """
    B, in_f = x.shape
    out_f, in_f2 = weight.shape
    assert in_f == in_f2

    def_rows, def_vmem = _device_defaults()
    if block_rows is None:
        block_rows = def_rows
    if vmem_limit_bytes is None:
        vmem_limit_bytes = def_vmem

    # --- One-time weight / bias packing (tiny; done by XLA outside the kernel).
    wt = weight.T.astype(x.dtype)                                    # (64, 10)
    zeros = jnp.zeros_like(wt)
    w_packed = jnp.concatenate(
        [jnp.concatenate([wt, zeros], axis=1),
         jnp.concatenate([zeros, wt], axis=1)], axis=0)              # (128, 20)
    b_packed = jnp.concatenate([bias, bias]).reshape(1, 2 * out_f)
    b_packed = b_packed.astype(jnp.float32)                          # (1, 20)

    # --- Pack two logical rows per 128-lane row (kills 64->128 lane padding).
    B_pad = B + (B % 2)
    if B_pad != B:
        x = jnp.concatenate([x, jnp.zeros((1, in_f), x.dtype)], axis=0)
    Bp = B_pad // 2
    xp = x.reshape(Bp, 2 * in_f)                                     # (Bp, 128)

    # --- Batch tile (in packed rows).
    rows_per_block = max(8, (block_rows // 2) // 8 * 8)
    if Bp <= 8:
        tb = Bp                                # single tiny block (full dim ok)
    else:
        # Guarantee >= 2 grid tiles so the "parallel" axis can shard across
        # both v7x TensorCores; cap at the generation's tile budget.
        tb = min(rows_per_block, _round_up(pl.cdiv(Bp, 2), 8))
    grid = (pl.cdiv(Bp, tb),)

    itemsize = jnp.dtype(x.dtype).itemsize
    cost = pl.CostEstimate(
        flops=2 * Bp * (2 * in_f) * (2 * out_f),
        transcendentals=0,
        bytes_accessed=(Bp * 2 * in_f + Bp * 2 * out_f) * itemsize
        + (2 * in_f) * (2 * out_f) * itemsize + 2 * out_f * 4,
    )

    out_packed = pl.pallas_call(
        _linear_kernel,
        out_shape=jax.ShapeDtypeStruct((Bp, 2 * out_f), x.dtype),
        grid_spec=pltpu.PrefetchScalarGridSpec(
            num_scalar_prefetch=0,
            grid=grid,
            in_specs=[
                pl.BlockSpec((tb, 2 * in_f), lambda i: (i, 0)),         # x: batch-tiled
                pl.BlockSpec((2 * in_f, 2 * out_f), lambda i: (0, 0)),  # weight: resident
                pl.BlockSpec((1, 2 * out_f), lambda i: (0, 0)),         # bias: resident
            ],
            out_specs=pl.BlockSpec((tb, 2 * out_f), lambda i: (i, 0)),
        ),
        compiler_params=pltpu.CompilerParams(
            dimension_semantics=("parallel",),
            vmem_limit_bytes=vmem_limit_bytes,
        ),
        cost_estimate=cost,
    )(xp, w_packed, b_packed)

    # Unpack: (Bp, 20) -> (B_pad, 10) -> drop the possible zero pad row.
    out = out_packed.reshape(B_pad, out_f)
    return out[:B] if B_pad != B else out


def init_params(key, in_features=64, out_features=10):
    # Deterministic init mimicking PyTorch nn.Linear defaults
    # (kaiming-uniform weight, uniform bias in +/- 1/sqrt(fan_in)).
    kw, kb = jax.random.split(key)
    bound = 1.0 / math.sqrt(in_features)
    weight = jax.random.uniform(
        kw, (out_features, in_features), jnp.float32, -bound, bound)
    bias = jax.random.uniform(
        kb, (out_features,), jnp.float32, -bound, bound)
    return weight, bias


if __name__ == "__main__":
    key = jax.random.PRNGKey(0)
    k_x, k_p = jax.random.split(key)
    weight, bias = init_params(k_p)

    def ref_fn(xx):
        return jnp.dot(xx, weight.T, precision=lax.Precision.HIGHEST) + bias

    # Small-shape case matching the module's typical use (single packed block).
    B = 8
    x = jax.random.normal(k_x, (B, 64), jnp.float32)
    out = jax.block_until_ready(mlp_out_linear(x, weight, bias))
    assert out.shape == (B, 10)
    assert jnp.allclose(out, ref_fn(x), atol=1e-5, rtol=1e-5)

    # Multi-tile case: odd batch, partial last tile, >= 2 grid steps
    # (exercises the pipelined path and the megacore-friendly tiling).
    B2 = 1031
    x2 = jax.random.normal(k_x, (B2, 64), jnp.float32)
    out2 = jax.block_until_ready(mlp_out_linear(x2, weight, bias, block_rows=512))
    assert out2.shape == (B2, 10)
    assert jnp.allclose(out2, ref_fn(x2), atol=1e-5, rtol=1e-5)

    print("KERNEL_OK")
</pallas_src>

<mosaic_0001>
module attributes {stable_mosaic.version = 11 : i64} {
  func.func @_linear_kernel(%arg0: i32, %arg1: memref<4x128xf32, #tpu.memory_space<vmem>>, %arg2: memref<128x20xf32, #tpu.memory_space<vmem>>, %arg3: memref<1x20xf32, #tpu.memory_space<vmem>>, %arg4: memref<4x20xf32, #tpu.memory_space<vmem>>) attributes {dimension_semantics = [#tpu.dimension_semantics<parallel>], iteration_bounds = array<i64: 1>, scalar_prefetch = 0 : i64, scratch_operands = 0 : i64, tpu.core_type = #tpu.core_type<tc>, window_params = [{transform_indices = @transform_0, window_bounds = array<i64: 4, 128>}, {pipeline_mode = #tpu.pipeline_mode<synchronous>, transform_indices = @transform_1, window_bounds = array<i64: 128, 20>}, {pipeline_mode = #tpu.pipeline_mode<synchronous>, transform_indices = @transform_2, window_bounds = array<i64: 1, 20>}, {transform_indices = @transform_3, window_bounds = array<i64: 4, 20>}]} {
    %c0 = arith.constant 0 : index
    %c0_0 = arith.constant 0 : index
    %0 = vector.load %arg1[%c0, %c0_0] : memref<4x128xf32, #tpu.memory_space<vmem>>, vector<4x128xf32>
    %c0_1 = arith.constant 0 : index
    %c0_2 = arith.constant 0 : index
    %1 = vector.load %arg2[%c0_1, %c0_2] : memref<128x20xf32, #tpu.memory_space<vmem>>, vector<128x20xf32>
    %cst = arith.constant dense<0.000000e+00> : vector<4x20xf32>
    %2 = tpu.matmul %0, %1, %cst {dimension_numbers = #tpu.dot_dimension_numbers<[1], [0], [0], [1], [0, 0, 1, 1], [], []>, precision = #tpu.contract_precision<fp32>} : vector<4x128xf32>, vector<128x20xf32>, vector<4x20xf32> -> vector<4x20xf32>
    %c0_3 = arith.constant 0 : index
    %c0_4 = arith.constant 0 : index
    %3 = vector.load %arg3[%c0_3, %c0_4] : memref<1x20xf32, #tpu.memory_space<vmem>>, vector<1x20xf32>
    %4 = vector.broadcast %3 : vector<1x20xf32> to vector<4x20xf32>
    %5 = arith.addf %2, %4 : vector<4x20xf32>
    %c0_5 = arith.constant 0 : index
    %c0_6 = arith.constant 0 : index
    %6 = vector.load %arg4[%c0_5, %c0_6] : memref<4x20xf32, #tpu.memory_space<vmem>>, vector<4x20xf32>
    tpu.vector_store %arg4[%c0_5, %c0_6], %5 {strides = array<i32>} : memref<4x20xf32, #tpu.memory_space<vmem>>, vector<4x20xf32>,
    return
  }
  func.func @transform_0(%arg0: i32) -> (i32, i32) {
    %c0_i32 = arith.constant 0 : i32
    %c0_i32_0 = arith.constant 0 : i32
    return %arg0, %c0_i32 : i32, i32
  }
  func.func @transform_1(%arg0: i32) -> (i32, i32) {
    %c0_i32 = arith.constant 0 : i32
    %c0_i32_0 = arith.constant 0 : i32
    %c0_i32_1 = arith.constant 0 : i32
    return %c0_i32, %c0_i32_0 : i32, i32
  }
  func.func @transform_2(%arg0: i32) -> (i32, i32) {
    %c0_i32 = arith.constant 0 : i32
    %c0_i32_0 = arith.constant 0 : i32
    %c0_i32_1 = arith.constant 0 : i32
    return %c0_i32, %c0_i32_0 : i32, i32
  }
  func.func @transform_3(%arg0: i32) -> (i32, i32) {
    %c0_i32 = arith.constant 0 : i32
    %c0_i32_0 = arith.constant 0 : i32
    return %arg0, %c0_i32 : i32, i32
  }
}

</mosaic_0001>

<llo_original>
// kernel: tpu_custom_call.1
$region0: #{tpu_custom_call.1}
  #allocation0 [shape = 'u32[]', space=smem, size = 0x4, offset = 0x4, fixed_abs, tag = 'smem constant byte address 0x4 - core index']
  #allocation1 [shape = 'u32[144,128]{1,0:T(1,128)}', space=vmem, size = 0x12000, scoped, tag = 'internal scratch']
  %s0 = inlined_call_operand.hbm [shape: f32[4,128], index: 0, kind: input, shape index: {}]
  %s1 = inlined_call_operand.hbm [shape: f32[128,20], index: 1, kind: input, shape index: {}]
  %s2 = inlined_call_operand.hbm [shape: f32[1,20], index: 2, kind: input, shape index: {}]
  %s3 = inlined_call_operand.hbm [shape: f32[4,20], index: 3, kind: output, shape index: {}]
  %s4 = sld [smem:[#allocation0]]
  $region34: #{tpu_custom_call.1} parent=0
    _
  %s6 = ssub.s32 1, %s4
  %s7 = scalar_select 0, %s6, %s4
  $region1: #{tpu_custom_call.1} parent=0
    #allocation2 [shape = 'u8[2048]{0}', space=vmem, size = 0x800, scoped, tag = 'input window, operand 0, single buffered']
    #allocation3 [shape = 's32[1]{0}', space=sflag, size = 0x4, scoped, tag = 'scoped memory for tpu_custom_call.1']
    #allocation4 [shape = 's32[1]{0}', space=sflag, size = 0x4, scoped, tag = 'scoped memory for tpu_custom_call.1']
    #allocation5 [shape = 'u8[65536]{0}', space=vmem, size = 0x10000, scoped, tag = 'input window, operand 1, single buffered']
    #allocation6 [shape = 's32[1]{0}', space=sflag, size = 0x4, scoped, tag = 'scoped memory for tpu_custom_call.1']
    #allocation7 [shape = 'u8[512]{0}', space=vmem, size = 0x400, scoped, tag = 'input window, operand 2, single buffered']
    #allocation8 [shape = 'u8[2048]{0}', space=vmem, size = 0x800, scoped, tag = 'output window, operand 0, single buffered']
    %8 = vsyncpa [#allocation3], 0
    %9 = vsyncpa [#allocation6], 0
    %10 = vsyncpa [#allocation4], 0
    // Predicated region
    $region2: #{tpu_custom_call.1} parent=1 // pred_check
      _
    $region3: #{tpu_custom_call.1} parent=1 // pred_check_branch
      %12 = sbr.rel (0) target = $region5
    $region4: #{tpu_custom_call.1} parent=1 // pred_region
      %s14 = ssub.s32 64, 64
      %15 = vsyncadd [#allocation3], %s14
      %s17 = sshll.u32 [#allocation2], 4
      %s18 = int_to_ptr.vmem [resolvable:$true] %s17
      %20 = dma.hbm_to_vmem [thread:$0]  %s0, 64, %s18, [#allocation3]
    $region5: #{tpu_custom_call.1} parent=1 // pred_fallthru
      _
    // Predicated region
    $region6: #{tpu_custom_call.1} parent=1 // pred_check
      _
    $region7: #{tpu_custom_call.1} parent=1 // pred_check_branch
      %22 = sbr.rel (0) target = $region9
    $region8: #{tpu_custom_call.1} parent=1 // pred_region
      %s24 = ssub.s32 2048, 2048
      %25 = vsyncadd [#allocation6], %s24
      %s26 = sshll.u32 [#allocation5], 4
      %s27 = int_to_ptr.vmem [resolvable:$true] %s26
      %32 = dma.hbm_to_vmem [thread:$0]  %s1, 2048, %s27, [#allocation6], 128, 128, 8
    $region9: #{tpu_custom_call.1} parent=1 // pred_fallthru
      _
    // Predicated region
    $region10: #{tpu_custom_call.1} parent=1 // pred_check
      _
    $region11: #{tpu_custom_call.1} parent=1 // pred_check_branch
      %34 = sbr.rel (0) target = $region13
    $region12: #{tpu_custom_call.1} parent=1 // pred_region
      %s36 = ssub.s32 16, 16
      %37 = vsyncadd [#allocation6], %s36
      %s39 = sshll.u32 [#allocation7], 4
      %s40 = int_to_ptr.vmem [resolvable:$true] %s39
      %42 = dma.hbm_to_vmem [thread:$0]  %s2, 16, %s40, [#allocation6]
    $region13: #{tpu_custom_call.1} parent=1 // pred_fallthru
      _
    // Predicated region
    $region14: #{tpu_custom_call.1} parent=1 // pred_check
      _
    $region15: #{tpu_custom_call.1} parent=1 // pred_check_branch
      %44 = sbr.rel (0) target = $region17
    $region16: #{tpu_custom_call.1} parent=1 // pred_region
      %45 = dma.done [#allocation3], 64
    $region17: #{tpu_custom_call.1} parent=1 // pred_fallthru
      _
    // Predicated region
    $region18: #{tpu_custom_call.1} parent=1 // pred_check
      _
    $region19: #{tpu_custom_call.1} parent=1 // pred_check_branch
      %47 = sbr.rel (0) target = $region21
    $region20: #{tpu_custom_call.1} parent=1 // pred_region
      %48 = dma.done [#allocation6], 2048
    $region21: #{tpu_custom_call.1} parent=1 // pred_fallthru
      _
    // Predicated region
    $region22: #{tpu_custom_call.1} parent=1 // pred_check
      _
    $region23: #{tpu_custom_call.1} parent=1 // pred_check_branch
      %50 = sbr.rel (0) target = $region25
    $region24: #{tpu_custom_call.1} parent=1 // pred_region
      %51 = dma.done [#allocation6], 16
    $region25: #{tpu_custom_call.1} parent=1 // pred_fallthru
      _
    %v52 = vld [vmem:[#allocation2] sm:$0xf]
    %v53 = vld [vmem:[#allocation5] sm:$0xff]
    %v54 = vld [vmem:[#allocation5 + $0x8] sm:$0xff]
    %v55 = vld [vmem:[#allocation5 + $0x10] sm:$0xff]
    %v56 = vld [vmem:[#allocation5 + $0x18] sm:$0xff]
    %v57 = vld [vmem:[#allocation5 + $0x20] sm:$0xff]
    %v58 = vld [vmem:[#allocation5 + $0x28] sm:$0xff]
    %v59 = vld [vmem:[#allocation5 + $0x30] sm:$0xff]
    %v60 = vld [vmem:[#allocation5 + $0x38] sm:$0xff]
    %v61 = vld [vmem:[#allocation5 + $0x40] sm:$0xff]
    %v62 = vld [vmem:[#allocation5 + $0x48] sm:$0xff]
    %v63 = vld [vmem:[#allocation5 + $0x50] sm:$0xff]
    %v64 = vld [vmem:[#allocation5 + $0x58] sm:$0xff]
    %v65 = vld [vmem:[#allocation5 + $0x60] sm:$0xff]
    %v66 = vld [vmem:[#allocation5 + $0x68] sm:$0xff]
    %v67 = vld [vmem:[#allocation5 + $0x70] sm:$0xff]
    %v68 = vld [vmem:[#allocation5 + $0x78] sm:$0xff]
    %v69 = vld [vmem:[#allocation7] sm:$0x1]
    %v71 = vlaneseq
    %v72 = vshrl.u32 %v71, 7
    %v73 = vsub.s32 0, %v72
    %v74 = vrot.slane %v69, %v73
    %76 = vmatprep.subr.mxu0 0.0
    %v77 = vand.u32 %v53, 4294901760
    %78 = vmatpush1.msra.mxu0 %v77
    %79 = vmatprep.subr.mxu0 0.0
    %v80 = vand.u32 %v54, 4294901760
    %81 = vmatpush1.msra.mxu0 %v80
    %82 = vmatprep.subr.mxu0 0.0
    %v83 = vand.u32 %v55, 4294901760
    %84 = vmatpush1.msra.mxu0 %v83
    %85 = vmatprep.subr.mxu0 0.0
    %v86 = vand.u32 %v56, 4294901760
    %87 = vmatpush1.msra.mxu0 %v86
    %88 = vmatprep.subr.mxu0 0.0
    %v89 = vand.u32 %v57, 4294901760
    %90 = vmatpush1.msra.mxu0 %v89
    %91 = vmatprep.subr.mxu0 0.0
    %v92 = vand.u32 %v58, 4294901760
    %93 = vmatpush1.msra.mxu0 %v92
    %94 = vmatprep.subr.mxu0 0.0
    %v95 = vand.u32 %v59, 4294901760
    %96 = vmatpush1.msra.mxu0 %v95
    %97 = vmatprep.subr.mxu0 0.0
    %v98 = vand.u32 %v60, 4294901760
    %99 = vmatpush1.msra.mxu0 %v98
    %100 = vmatprep.subr.mxu0 0.0
    %v101 = vand.u32 %v61, 4294901760
    %102 = vmatpush1.msra.mxu0 %v101
    %103 = vmatprep.subr.mxu0 0.0
    %v104 = vand.u32 %v62, 4294901760
    %105 = vmatpush1.msra.mxu0 %v104
    %106 = vmatprep.subr.mxu0 0.0
    %v107 = vand.u32 %v63, 4294901760
    %108 = vmatpush1.msra.mxu0 %v107
    %109 = vmatprep.subr.mxu0 0.0
    %v110 = vand.u32 %v64, 4294901760
    %111 = vmatpush1.msra.mxu0 %v110
    %112 = vmatprep.subr.mxu0 0.0
    %v113 = vand.u32 %v65, 4294901760
    %114 = vmatpush1.msra.mxu0 %v113
    %115 = vmatprep.subr.mxu0 0.0
    %v116 = vand.u32 %v66, 4294901760
    %117 = vmatpush1.msra.mxu0 %v116
    %118 = vmatprep.subr.mxu0 0.0
    %v119 = vand.u32 %v67, 4294901760
    %120 = vmatpush1.msra.mxu0 %v119
    %121 = vmatprep.subr.mxu0 0.0
    %v122 = vand.u32 %v68, 4294901760
    %123 = vmatpush1.msra.mxu0 %v122
    %124 = vmatprep.subr.mxu0 0.0
    %125 = vmatpush1.msra.mxu0 0.0
    %126 = vmatprep.subr.mxu0 0.0
    %127 = vmatpush1.msra.mxu0 0.0
    %128 = vmatprep.subr.mxu0 0.0
    %129 = vmatpush1.msra.mxu0 0.0
    %130 = vmatprep.subr.mxu0 0.0
    %131 = vmatpush1.msra.mxu0 0.0
    %132 = vmatprep.subr.mxu0 0.0
    %133 = vmatpush1.msra.mxu0 0.0
    %134 = vmatprep.subr.mxu0 0.0
    %135 = vmatpush1.msra.mxu0 0.0
    %136 = vmatprep.subr.mxu0 0.0
    %137 = vmatpush1.msra.mxu0 0.0
    %138 = vmatprep.subr.mxu0 0.0
    %139 = vmatpush1.msra.mxu0 0.0
    %140 = vmatprep.subr.mxu0 0.0
    %141 = vmatpush1.msra.mxu0 0.0
    %142 = vmatprep.subr.mxu0 0.0
    %143 = vmatpush1.msra.mxu0 0.0
    %144 = vmatprep.subr.mxu0 0.0
    %145 = vmatpush1.msra.mxu0 0.0
    %146 = vmatprep.subr.mxu0 0.0
    %147 = vmatpush1.msra.mxu0 0.0
    %148 = vmatprep.subr.mxu0 0.0
    %149 = vmatpush1.msra.mxu0 0.0
    %150 = vmatprep.subr.mxu0 0.0
    %151 = vmatpush1.msra.mxu0 0.0
    %152 = vmatprep.subr.mxu0 0.0
    %153 = vmatpush1.msra.mxu0 0.0
    %154 = vmatprep.subr.mxu0 0.0
    %155 = vmatpush1.msra.mxu0 0.0
    %156 = vmatprep.mubr.f32.mxu0 0.0
    %v157 = vand.u32 %v52, 4294901760
    %v158 = vsub.f32 %v52, %v157
    %v159 = vand.u32 %v158, 4294901760
    %v160 = vsub.f32 %v158, %v159
    %v161 = vand.u32 %v160, 4294901760
    %162 = vmatmul.mubr.f32.gmra.mrb[0].mxu0 %v161
    %v163 = vpop.f32.mrb[0].mxu0
    %v164 = vadd.f32 %v74, %v163
    %v165 = vpop.f32.mrb[0].mxu0
    %166 = vdwg.mxu0
    %167 = vmatprep.subr.mxu0 0.0
    %v168 = vand.u32 %v53, 4294901760
    %v169 = vsub.f32 %v53, %v168
    %v170 = vand.u32 %v169, 4294901760
    %v171 = vsub.f32 %v169, %v170
    %v172 = vand.u32 %v171, 4294901760
    %173 = vmatpush1.msra.mxu0 %v172
    %174 = vmatprep.subr.mxu0 0.0
    %v175 = vand.u32 %v54, 4294901760
    %v176 = vsub.f32 %v54, %v175
    %v177 = vand.u32 %v176, 4294901760
    %v178 = vsub.f32 %v176, %v177
    %v179 = vand.u32 %v178, 4294901760
    %180 = vmatpush1.msra.mxu0 %v179
    %181 = vmatprep.subr.mxu0 0.0
    %v182 = vand.u32 %v55, 4294901760
    %v183 = vsub.f32 %v55, %v182
    %v184 = vand.u32 %v183, 4294901760
    %v185 = vsub.f32 %v183, %v184
    %v186 = vand.u32 %v185, 4294901760
    %187 = vmatpush1.msra.mxu0 %v186
    %188 = vmatprep.subr.mxu0 0.0
    %v189 = vand.u32 %v56, 4294901760
    %v190 = vsub.f32 %v56, %v189
    %v191 = vand.u32 %v190, 4294901760
    %v192 = vsub.f32 %v190, %v191
    %v193 = vand.u32 %v192, 4294901760
    %194 = vmatpush1.msra.mxu0 %v193
    %195 = vmatprep.subr.mxu0 0.0
    %v196 = vand.u32 %v57, 4294901760
    %v197 = vsub.f32 %v57, %v196
    %v198 = vand.u32 %v197, 4294901760
    %v199 = vsub.f32 %v197, %v198
    %v200 = vand.u32 %v199, 4294901760
    %201 = vmatpush1.msra.mxu0 %v200
    %202 = vmatprep.subr.mxu0 0.0
    %v203 = vand.u32 %v58, 4294901760
    %v204 = vsub.f32 %v58, %v203
    %v205 = vand.u32 %v204, 4294901760
    %v206 = vsub.f32 %v204, %v205
    %v207 = vand.u32 %v206, 4294901760
    %208 = vmatpush1.msra.mxu0 %v207
    %209 = vmatprep.subr.mxu0 0.0
    %v210 = vand.u32 %v59, 4294901760
    %v211 = vsub.f32 %v59, %v210
    %v212 = vand.u32 %v211, 4294901760
    %v213 = vsub.f32 %v211, %v212
    %v214 = vand.u32 %v213, 4294901760
    %215 = vmatpush1.msra.mxu0 %v214
    %216 = vmatprep.subr.mxu0 0.0
    %v217 = vand.u32 %v60, 4294901760
    %v218 = vsub.f32 %v60, %v217
    %v219 = vand.u32 %v218, 4294901760
    %v220 = vsub.f32 %v218, %v219
    %v221 = vand.u32 %v220, 4294901760
    %222 = vmatpush1.msra.mxu0 %v221
    %223 = vmatprep.subr.mxu0 0.0
    %v224 = vand.u32 %v61, 4294901760
    %v225 = vsub.f32 %v61, %v224
    %v226 = vand.u32 %v225, 4294901760
    %v227 = vsub.f32 %v225, %v226
    %v228 = vand.u32 %v227, 4294901760
    %229 = vmatpush1.msra.mxu0 %v228
    %230 = vmatprep.subr.mxu0 0.0
    %v231 = vand.u32 %v62, 4294901760
    %v232 = vsub.f32 %v62, %v231
    %v233 = vand.u32 %v232, 4294901760
    %v234 = vsub.f32 %v232, %v233
    %v235 = vand.u32 %v234, 4294901760
    %236 = vmatpush1.msra.mxu0 %v235
    %237 = vmatprep.subr.mxu0 0.0
    %v238 = vand.u32 %v63, 4294901760
    %v239 = vsub.f32 %v63, %v238
    %v240 = vand.u32 %v239, 4294901760
    %v241 = vsub.f32 %v239, %v240
    %v242 = vand.u32 %v241, 4294901760
    %243 = vmatpush1.msra.mxu0 %v242
    %244 = vmatprep.subr.mxu0 0.0
    %v245 = vand.u32 %v64, 4294901760
    %v246 = vsub.f32 %v64, %v245
    %v247 = vand.u32 %v246, 4294901760
    %v248 = vsub.f32 %v246, %v247
    %v249 = vand.u32 %v248, 4294901760
    %250 = vmatpush1.msra.mxu0 %v249
    %251 = vmatprep.subr.mxu0 0.0
    %v252 = vand.u32 %v65, 4294901760
    %v253 = vsub.f32 %v65, %v252
    %v254 = vand.u32 %v253, 4294901760
    %v255 = vsub.f32 %v253, %v254
    %v256 = vand.u32 %v255, 4294901760
    %257 = vmatpush1.msra.mxu0 %v256
    %258 = vmatprep.subr.mxu0 0.0
    %v259 = vand.u32 %v66, 4294901760
    %v260 = vsub.f32 %v66, %v259
    %v261 = vand.u32 %v260, 4294901760
    %v262 = vsub.f32 %v260, %v261
    %v263 = vand.u32 %v262, 4294901760
    %264 = vmatpush1.msra.mxu0 %v263
    %265 = vmatprep.subr.mxu0 0.0
    %v266 = vand.u32 %v67, 4294901760
    %v267 = vsub.f32 %v67, %v266
    %v268 = vand.u32 %v267, 4294901760
    %v269 = vsub.f32 %v267, %v268
    %v270 = vand.u32 %v269, 4294901760
    %271 = vmatpush1.msra.mxu0 %v270
    %272 = vmatprep.subr.mxu0 0.0
    %v273 = vand.u32 %v68, 4294901760
    %v274 = vsub.f32 %v68, %v273
    %v275 = vand.u32 %v274, 4294901760
    %v276 = vsub.f32 %v274, %v275
    %v277 = vand.u32 %v276, 4294901760
    %278 = vmatpush1.msra.mxu0 %v277
    %279 = vmatprep.subr.mxu0 0.0
    %280 = vmatpush1.msra.mxu0 0.0
    %281 = vmatprep.subr.mxu0 0.0
    %282 = vmatpush1.msra.mxu0 0.0
    %283 = vmatprep.subr.mxu0 0.0
    %284 = vmatpush1.msra.mxu0 0.0
    %285 = vmatprep.subr.mxu0 0.0
    %286 = vmatpush1.msra.mxu0 0.0
    %287 = vmatprep.subr.mxu0 0.0
    %288 = vmatpush1.msra.mxu0 0.0
    %289 = vmatprep.subr.mxu0 0.0
    %290 = vmatpush1.msra.mxu0 0.0
    %291 = vmatprep.subr.mxu0 0.0
    %292 = vmatpush1.msra.mxu0 0.0
    %293 = vmatprep.subr.mxu0 0.0
    %294 = vmatpush1.msra.mxu0 0.0
    %295 = vmatprep.subr.mxu0 0.0
    %296 = vmatpush1.msra.mxu0 0.0
    %297 = vmatprep.subr.mxu0 0.0
    %298 = vmatpush1.msra.mxu0 0.0
    %299 = vmatprep.subr.mxu0 0.0
    %300 = vmatpush1.msra.mxu0 0.0
    %301 = vmatprep.subr.mxu0 0.0
    %302 = vmatpush1.msra.mxu0 0.0
    %303 = vmatprep.subr.mxu0 0.0
    %304 = vmatpush1.msra.mxu0 0.0
    %305 = vmatprep.subr.mxu0 0.0
    %306 = vmatpush1.msra.mxu0 0.0
    %307 = vmatprep.subr.mxu0 0.0
    %308 = vmatpush1.msra.mxu0 0.0
    %309 = vmatprep.subr.mxu0 0.0
    %310 = vmatpush1.msra.mxu0 0.0
    %311 = vmatprep.mubr.f32.mxu0 0.0
    %v312 = vand.u32 %v52, 4294901760
    %313 = vmatmul.mubr.f32.gmra.mrb[0].mxu0 %v312
    %v314 = vpop.f32.mrb[0].mxu0
    %v315 = vadd.f32 %v164, %v314
    %v316 = vpop.f32.mrb[0].mxu0
    %317 = vdwg.mxu0
    %318 = vmatprep.subr.mxu0 0.0
    %v319 = vand.u32 %v53, 4294901760
    %v320 = vsub.f32 %v53, %v319
    %321 = vmatpush1.msra.mxu0 %v320
    %322 = vmatprep.subr.mxu0 0.0
    %v323 = vand.u32 %v54, 4294901760
    %v324 = vsub.f32 %v54, %v323
    %325 = vmatpush1.msra.mxu0 %v324
    %326 = vmatprep.subr.mxu0 0.0
    %v327 = vand.u32 %v55, 4294901760
    %v328 = vsub.f32 %v55, %v327
    %329 = vmatpush1.msra.mxu0 %v328
    %330 = vmatprep.subr.mxu0 0.0
    %v331 = vand.u32 %v56, 4294901760
    %v332 = vsub.f32 %v56, %v331
    %333 = vmatpush1.msra.mxu0 %v332
    %334 = vmatprep.subr.mxu0 0.0
    %v335 = vand.u32 %v57, 4294901760
    %v336 = vsub.f32 %v57, %v335
    %337 = vmatpush1.msra.mxu0 %v336
    %338 = vmatprep.subr.mxu0 0.0
    %v339 = vand.u32 %v58, 4294901760
    %v340 = vsub.f32 %v58, %v339
    %341 = vmatpush1.msra.mxu0 %v340
    %342 = vmatprep.subr.mxu0 0.0
    %v343 = vand.u32 %v59, 4294901760
    %v344 = vsub.f32 %v59, %v343
    %345 = vmatpush1.msra.mxu0 %v344
    %346 = vmatprep.subr.mxu0 0.0
    %v347 = vand.u32 %v60, 4294901760
    %v348 = vsub.f32 %v60, %v347
    %349 = vmatpush1.msra.mxu0 %v348
    %350 = vmatprep.subr.mxu0 0.0
    %v351 = vand.u32 %v61, 4294901760
    %v352 = vsub.f32 %v61, %v351
    %353 = vmatpush1.msra.mxu0 %v352
    %354 = vmatprep.subr.mxu0 0.0
    %v355 = vand.u32 %v62, 4294901760
    %v356 = vsub.f32 %v62, %v355
    %357 = vmatpush1.msra.mxu0 %v356
    %358 = vmatprep.subr.mxu0 0.0
    %v359 = vand.u32 %v63, 4294901760
    %v360 = vsub.f32 %v63, %v359
    %361 = vmatpush1.msra.mxu0 %v360
    %362 = vmatprep.subr.mxu0 0.0
    %v363 = vand.u32 %v64, 4294901760
    %v364 = vsub.f32 %v64, %v363
    %365 = vmatpush1.msra.mxu0 %v364
    %366 = vmatprep.subr.mxu0 0.0
    %v367 = vand.u32 %v65, 4294901760
    %v368 = vsub.f32 %v65, %v367
    %369 = vmatpush1.msra.mxu0 %v368
    %370 = vmatprep.subr.mxu0 0.0
    %v371 = vand.u32 %v66, 4294901760
    %v372 = vsub.f32 %v66, %v371
    %373 = vmatpush1.msra.mxu0 %v372
    %374 = vmatprep.subr.mxu0 0.0
    %v375 = vand.u32 %v67, 4294901760
    %v376 = vsub.f32 %v67, %v375
    %377 = vmatpush1.msra.mxu0 %v376
    %378 = vmatprep.subr.mxu0 0.0
    %v379 = vand.u32 %v68, 4294901760
    %v380 = vsub.f32 %v68, %v379
    %381 = vmatpush1.msra.mxu0 %v380
    %382 = vmatprep.subr.mxu0 0.0
    %383 = vmatpush1.msra.mxu0 0.0
    %384 = vmatprep.subr.mxu0 0.0
    %385 = vmatpush1.msra.mxu0 0.0
    %386 = vmatprep.subr.mxu0 0.0
    %387 = vmatpush1.msra.mxu0 0.0
    %388 = vmatprep.subr.mxu0 0.0
    %389 = vmatpush1.msra.mxu0 0.0
    %390 = vmatprep.subr.mxu0 0.0
    %391 = vmatpush1.msra.mxu0 0.0
    %392 = vmatprep.subr.mxu0 0.0
    %393 = vmatpush1.msra.mxu0 0.0
    %394 = vmatprep.subr.mxu0 0.0
    %395 = vmatpush1.msra.mxu0 0.0
    %396 = vmatprep.subr.mxu0 0.0
    %397 = vmatpush1.msra.mxu0 0.0
    %398 = vmatprep.subr.mxu0 0.0
    %399 = vmatpush1.msra.mxu0 0.0
    %400 = vmatprep.subr.mxu0 0.0
    %401 = vmatpush1.msra.mxu0 0.0
    %402 = vmatprep.subr.mxu0 0.0
    %403 = vmatpush1.msra.mxu0 0.0
    %404 = vmatprep.subr.mxu0 0.0
    %405 = vmatpush1.msra.mxu0 0.0
    %406 = vmatprep.subr.mxu0 0.0
    %407 = vmatpush1.msra.mxu0 0.0
    %408 = vmatprep.subr.mxu0 0.0
    %409 = vmatpush1.msra.mxu0 0.0
    %410 = vmatprep.subr.mxu0 0.0
    %411 = vmatpush1.msra.mxu0 0.0
    %412 = vmatprep.subr.mxu0 0.0
    %413 = vmatpush1.msra.mxu0 0.0
    %414 = vmatprep.mubr.f32.mxu0 0.0
    %v415 = vand.u32 %v52, 4294901760
    %v416 = vsub.f32 %v52, %v415
    %417 = vmatmul.mubr.f32.gmra.mrb[0].mxu0 %v416
    %v418 = vpop.f32.mrb[0].mxu0
    %v419 = vadd.f32 %v315, %v418
    %v420 = vpop.f32.mrb[0].mxu0
    %421 = vdwg.mxu0
    %422 = vmatprep.subr.mxu0 0.0
    %v423 = vand.u32 %v53, 4294901760
    %424 = vmatpush1.msra.mxu0 %v423
    %425 = vmatprep.subr.mxu0 0.0
    %v426 = vand.u32 %v54, 4294901760
    %427 = vmatpush1.msra.mxu0 %v426
    %428 = vmatprep.subr.mxu0 0.0
    %v429 = vand.u32 %v55, 4294901760
    %430 = vmatpush1.msra.mxu0 %v429
    %431 = vmatprep.subr.mxu0 0.0
    %v432 = vand.u32 %v56, 4294901760
    %433 = vmatpush1.msra.mxu0 %v432
    %434 = vmatprep.subr.mxu0 0.0
    %v435 = vand.u32 %v57, 4294901760
    %436 = vmatpush1.msra.mxu0 %v435
    %437 = vmatprep.subr.mxu0 0.0
    %v438 = vand.u32 %v58, 4294901760
    %439 = vmatpush1.msra.mxu0 %v438
    %440 = vmatprep.subr.mxu0 0.0
    %v441 = vand.u32 %v59, 4294901760
    %442 = vmatpush1.msra.mxu0 %v441
    %443 = vmatprep.subr.mxu0 0.0
    %v444 = vand.u32 %v60, 4294901760
    %445 = vmatpush1.msra.mxu0 %v444
    %446 = vmatprep.subr.mxu0 0.0
    %v447 = vand.u32 %v61, 4294901760
    %448 = vmatpush1.msra.mxu0 %v447
    %449 = vmatprep.subr.mxu0 0.0
    %v450 = vand.u32 %v62, 4294901760
    %451 = vmatpush1.msra.mxu0 %v450
    %452 = vmatprep.subr.mxu0 0.0
    %v453 = vand.u32 %v63, 4294901760
    %454 = vmatpush1.msra.mxu0 %v453
    %455 = vmatprep.subr.mxu0 0.0
    %v456 = vand.u32 %v64, 4294901760
    %457 = vmatpush1.msra.mxu0 %v456
    %458 = vmatprep.subr.mxu0 0.0
    %v459 = vand.u32 %v65, 4294901760
    %460 = vmatpush1.msra.mxu0 %v459
    %461 = vmatprep.subr.mxu0 0.0
    %v462 = vand.u32 %v66, 4294901760
    %463 = vmatpush1.msra.mxu0 %v462
    %464 = vmatprep.subr.mxu0 0.0
    %v465 = vand.u32 %v67, 4294901760
    %466 = vmatpush1.msra.mxu0 %v465
    %467 = vmatprep.subr.mxu0 0.0
    %v468 = vand.u32 %v68, 4294901760
    %469 = vmatpush1.msra.mxu0 %v468
    %470 = vmatprep.subr.mxu0 0.0
    %471 = vmatpush1.msra.mxu0 0.0
    %472 = vmatprep.subr.mxu0 0.0
    %473 = vmatpush1.msra.mxu0 0.0
    %474 = vmatprep.subr.mxu0 0.0
    %475 = vmatpush1.msra.mxu0 0.0
    %476 = vmatprep.subr.mxu0 0.0
    %477 = vmatpush1.msra.mxu0 0.0
    %478 = vmatprep.subr.mxu0 0.0
    %479 = vmatpush1.msra.mxu0 0.0
    %480 = vmatprep.subr.mxu0 0.0
    %481 = vmatpush1.msra.mxu0 0.0
    %482 = vmatprep.subr.mxu0 0.0
    %483 = vmatpush1.msra.mxu0 0.0
    %484 = vmatprep.subr.mxu0 0.0
    %485 = vmatpush1.msra.mxu0 0.0
    %486 = vmatprep.subr.mxu0 0.0
    %487 = vmatpush1.msra.mxu0 0.0
    %488 = vmatprep.subr.mxu0 0.0
    %489 = vmatpush1.msra.mxu0 0.0
    %490 = vmatprep.subr.mxu0 0.0
    %491 = vmatpush1.msra.mxu0 0.0
    %492 = vmatprep.subr.mxu0 0.0
    %493 = vmatpush1.msra.mxu0 0.0
    %494 = vmatprep.subr.mxu0 0.0
    %495 = vmatpush1.msra.mxu0 0.0
    %496 = vmatprep.subr.mxu0 0.0
    %497 = vmatpush1.msra.mxu0 0.0
    %498 = vmatprep.subr.mxu0 0.0
    %499 = vmatpush1.msra.mxu0 0.0
    %500 = vmatprep.subr.mxu0 0.0
    %501 = vmatpush1.msra.mxu0 0.0
    %502 = vmatprep.mubr.f32.mxu0 0.0
    %v503 = vand.u32 %v52, 4294901760
    %v504 = vsub.f32 %v52, %v503
    %v505 = vand.u32 %v504, 4294901760
    %506 = vmatmul.mubr.f32.gmra.mrb[0].mxu0 %v505
    %v507 = vpop.f32.mrb[0].mxu0
    %v508 = vadd.f32 %v419, %v507
    %v509 = vpop.f32.mrb[0].mxu0
    %510 = vdwg.mxu0
    %511 = vmatprep.subr.mxu0 0.0
    %v512 = vand.u32 %v53, 4294901760
    %v513 = vsub.f32 %v53, %v512
    %v514 = vand.u32 %v513, 4294901760
    %515 = vmatpush1.msra.mxu0 %v514
    %516 = vmatprep.subr.mxu0 0.0
    %v517 = vand.u32 %v54, 4294901760
    %v518 = vsub.f32 %v54, %v517
    %v519 = vand.u32 %v518, 4294901760
    %520 = vmatpush1.msra.mxu0 %v519
    %521 = vmatprep.subr.mxu0 0.0
    %v522 = vand.u32 %v55, 4294901760
    %v523 = vsub.f32 %v55, %v522
    %v524 = vand.u32 %v523, 4294901760
    %525 = vmatpush1.msra.mxu0 %v524
    %526 = vmatprep.subr.mxu0 0.0
    %v527 = vand.u32 %v56, 4294901760
    %v528 = vsub.f32 %v56, %v527
    %v529 = vand.u32 %v528, 4294901760
    %530 = vmatpush1.msra.mxu0 %v529
    %531 = vmatprep.subr.mxu0 0.0
    %v532 = vand.u32 %v57, 4294901760
    %v533 = vsub.f32 %v57, %v532
    %v534 = vand.u32 %v533, 4294901760
    %535 = vmatpush1.msra.mxu0 %v534
    %536 = vmatprep.subr.mxu0 0.0
    %v537 = vand.u32 %v58, 4294901760
    %v538 = vsub.f32 %v58, %v537
    %v539 = vand.u32 %v538, 4294901760
    %540 = vmatpush1.msra.mxu0 %v539
    %541 = vmatprep.subr.mxu0 0.0
    %v542 = vand.u32 %v59, 4294901760
    %v543 = vsub.f32 %v59, %v542
    %v544 = vand.u32 %v543, 4294901760
    %545 = vmatpush1.msra.mxu0 %v544
    %546 = vmatprep.subr.mxu0 0.0
    %v547 = vand.u32 %v60, 4294901760
    %v548 = vsub.f32 %v60, %v547
    %v549 = vand.u32 %v548, 4294901760
    %550 = vmatpush1.msra.mxu0 %v549
    %551 = vmatprep.subr.mxu0 0.0
    %v552 = vand.u32 %v61, 4294901760
    %v553 = vsub.f32 %v61, %v552
    %v554 = vand.u32 %v553, 4294901760
    %555 = vmatpush1.msra.mxu0 %v554
    %556 = vmatprep.subr.mxu0 0.0
    %v557 = vand.u32 %v62, 4294901760
    %v558 = vsub.f32 %v62, %v557
    %v559 = vand.u32 %v558, 4294901760
    %560 = vmatpush1.msra.mxu0 %v559
    %561 = vmatprep.subr.mxu0 0.0
    %v562 = vand.u32 %v63, 4294901760
    %v563 = vsub.f32 %v63, %v562
    %v564 = vand.u32 %v563, 4294901760
    %565 = vmatpush1.msra.mxu0 %v564
    %566 = vmatprep.subr.mxu0 0.0
    %v567 = vand.u32 %v64, 4294901760
    %v568 = vsub.f32 %v64, %v567
    %v569 = vand.u32 %v568, 4294901760
    %570 = vmatpush1.msra.mxu0 %v569
    %571 = vmatprep.subr.mxu0 0.0
    %v572 = vand.u32 %v65, 4294901760
    %v573 = vsub.f32 %v65, %v572
    %v574 = vand.u32 %v573, 4294901760
    %575 = vmatpush1.msra.mxu0 %v574
    %576 = vmatprep.subr.mxu0 0.0
    %v577 = vand.u32 %v66, 4294901760
    %v578 = vsub.f32 %v66, %v577
    %v579 = vand.u32 %v578, 4294901760
    %580 = vmatpush1.msra.mxu0 %v579
    %581 = vmatprep.subr.mxu0 0.0
    %v582 = vand.u32 %v67, 4294901760
    %v583 = vsub.f32 %v67, %v582
    %v584 = vand.u32 %v583, 4294901760
    %585 = vmatpush1.msra.mxu0 %v584
    %586 = vmatprep.subr.mxu0 0.0
    %v587 = vand.u32 %v68, 4294901760
    %v588 = vsub.f32 %v68, %v587
    %v589 = vand.u32 %v588, 4294901760
    %590 = vmatpush1.msra.mxu0 %v589
    %591 = vmatprep.subr.mxu0 0.0
    %592 = vmatpush1.msra.mxu0 0.0
    %593 = vmatprep.subr.mxu0 0.0
    %594 = vmatpush1.msra.mxu0 0.0
    %595 = vmatprep.subr.mxu0 0.0
    %596 = vmatpush1.msra.mxu0 0.0
    %597 = vmatprep.subr.mxu0 0.0
    %598 = vmatpush1.msra.mxu0 0.0
    %599 = vmatprep.subr.mxu0 0.0
    %600 = vmatpush1.msra.mxu0 0.0
    %601 = vmatprep.subr.mxu0 0.0
    %602 = vmatpush1.msra.mxu0 0.0
    %603 = vmatprep.subr.mxu0 0.0
    %604 = vmatpush1.msra.mxu0 0.0
    %605 = vmatprep.subr.mxu0 0.0
    %606 = vmatpush1.msra.mxu0 0.0
    %607 = vmatprep.subr.mxu0 0.0
    %608 = vmatpush1.msra.mxu0 0.0
    %609 = vmatprep.subr.mxu0 0.0
    %610 = vmatpush1.msra.mxu0 0.0
    %611 = vmatprep.subr.mxu0 0.0
    %612 = vmatpush1.msra.mxu0 0.0
    %613 = vmatprep.subr.mxu0 0.0
    %614 = vmatpush1.msra.mxu0 0.0
    %615 = vmatprep.subr.mxu0 0.0
    %616 = vmatpush1.msra.mxu0 0.0
    %617 = vmatprep.subr.mxu0 0.0
    %618 = vmatpush1.msra.mxu0 0.0
    %619 = vmatprep.subr.mxu0 0.0
    %620 = vmatpush1.msra.mxu0 0.0
    %621 = vmatprep.subr.mxu0 0.0
    %622 = vmatpush1.msra.mxu0 0.0
    %623 = vmatprep.mubr.f32.mxu0 0.0
    %v624 = vand.u32 %v52, 4294901760
    %625 = vmatmul.mubr.f32.gmra.mrb[0].mxu0 %v624
    %v626 = vpop.f32.mrb[0].mxu0
    %v627 = vadd.f32 %v508, %v626
    %v628 = vpop.f32.mrb[0].mxu0
    %629 = vdwg.mxu0
    %630 = vmatprep.subr.mxu0 0.0
    %v631 = vand.u32 %v53, 4294901760
    %632 = vmatpush1.msra.mxu0 %v631
    %633 = vmatprep.subr.mxu0 0.0
    %v634 = vand.u32 %v54, 4294901760
    %635 = vmatpush1.msra.mxu0 %v634
    %636 = vmatprep.subr.mxu0 0.0
    %v637 = vand.u32 %v55, 4294901760
    %638 = vmatpush1.msra.mxu0 %v637
    %639 = vmatprep.subr.mxu0 0.0
    %v640 = vand.u32 %v56, 4294901760
    %641 = vmatpush1.msra.mxu0 %v640
    %642 = vmatprep.subr.mxu0 0.0
    %v643 = vand.u32 %v57, 4294901760
    %644 = vmatpush1.msra.mxu0 %v643
    %645 = vmatprep.subr.mxu0 0.0
    %v646 = vand.u32 %v58, 4294901760
    %647 = vmatpush1.msra.mxu0 %v646
    %648 = vmatprep.subr.mxu0 0.0
    %v649 = vand.u32 %v59, 4294901760
    %650 = vmatpush1.msra.mxu0 %v649
    %651 = vmatprep.subr.mxu0 0.0
    %v652 = vand.u32 %v60, 4294901760
    %653 = vmatpush1.msra.mxu0 %v652
    %654 = vmatprep.subr.mxu0 0.0
    %v655 = vand.u32 %v61, 4294901760
    %656 = vmatpush1.msra.mxu0 %v655
    %657 = vmatprep.subr.mxu0 0.0
    %v658 = vand.u32 %v62, 4294901760
    %659 = vmatpush1.msra.mxu0 %v658
    %660 = vmatprep.subr.mxu0 0.0
    %v661 = vand.u32 %v63, 4294901760
    %662 = vmatpush1.msra.mxu0 %v661
    %663 = vmatprep.subr.mxu0 0.0
    %v664 = vand.u32 %v64, 4294901760
    %665 = vmatpush1.msra.mxu0 %v664
    %666 = vmatprep.subr.mxu0 0.0
    %v667 = vand.u32 %v65, 4294901760
    %668 = vmatpush1.msra.mxu0 %v667
    %669 = vmatprep.subr.mxu0 0.0
    %v670 = vand.u32 %v66, 4294901760
    %671 = vmatpush1.msra.mxu0 %v670
    %672 = vmatprep.subr.mxu0 0.0
    %v673 = vand.u32 %v67, 4294901760
    %674 = vmatpush1.msra.mxu0 %v673
    %675 = vmatprep.subr.mxu0 0.0
    %v676 = vand.u32 %v68, 4294901760
    %677 = vmatpush1.msra.mxu0 %v676
    %678 = vmatprep.subr.mxu0 0.0
    %679 = vmatpush1.msra.mxu0 0.0
    %680 = vmatprep.subr.mxu0 0.0
    %681 = vmatpush1.msra.mxu0 0.0
    %682 = vmatprep.subr.mxu0 0.0
    %683 = vmatpush1.msra.mxu0 0.0
    %684 = vmatprep.subr.mxu0 0.0
    %685 = vmatpush1.msra.mxu0 0.0
    %686 = vmatprep.subr.mxu0 0.0
    %687 = vmatpush1.msra.mxu0 0.0
    %688 = vmatprep.subr.mxu0 0.0
    %689 = vmatpush1.msra.mxu0 0.0
    %690 = vmatprep.subr.mxu0 0.0
    %691 = vmatpush1.msra.mxu0 0.0
    %692 = vmatprep.subr.mxu0 0.0
    %693 = vmatpush1.msra.mxu0 0.0
    %694 = vmatprep.subr.mxu0 0.0
    %695 = vmatpush1.msra.mxu0 0.0
    %696 = vmatprep.subr.mxu0 0.0
    %697 = vmatpush1.msra.mxu0 0.0
    %698 = vmatprep.subr.mxu0 0.0
    %699 = vmatpush1.msra.mxu0 0.0
    %700 = vmatprep.subr.mxu0 0.0
    %701 = vmatpush1.msra.mxu0 0.0
    %702 = vmatprep.subr.mxu0 0.0
    %703 = vmatpush1.msra.mxu0 0.0
    %704 = vmatprep.subr.mxu0 0.0
    %705 = vmatpush1.msra.mxu0 0.0
    %706 = vmatprep.subr.mxu0 0.0
    %707 = vmatpush1.msra.mxu0 0.0
    %708 = vmatprep.subr.mxu0 0.0
    %709 = vmatpush1.msra.mxu0 0.0
    %710 = vmatprep.mubr.f32.mxu0 0.0
    %v711 = vand.u32 %v52, 4294901760
    %712 = vmatmul.mubr.f32.gmra.mrb[0].mxu0 %v711
    %v713 = vpop.f32.mrb[0].mxu0
    %v714 = vadd.f32 %v627, %v713
    %v715 = vpop.f32.mrb[0].mxu0
    %716 = vdwg.mxu0
    %vm717 = vcmask 158720
    %718 = vst.msk [vmem:[#allocation8] sm:$0xf] %vm717, %v714
    // Predicated region
    $region26: #{tpu_custom_call.1} parent=1 // pred_check
      _
    $region27: #{tpu_custom_call.1} parent=1 // pred_check_branch
      %720 = sbr.rel (0) target = $region29
    $region28: #{tpu_custom_call.1} parent=1 // pred_region
      %s722 = ssub.s32 64, 64
      %723 = vsyncadd [#allocation4], %s722
      %s725 = sshll.u32 [#allocation8], 4
      %s726 = int_to_ptr.vmem [resolvable:$true] %s725
      %728 = dma.vmem_to_hbm [thread:$0]  %s726, 64, %s3, [#allocation4]
    $region29: #{tpu_custom_call.1} parent=1 // pred_fallthru
      _
    // Predicated region
    $region30: #{tpu_custom_call.1} parent=1 // pred_check
      _
    $region31: #{tpu_custom_call.1} parent=1 // pred_check_branch
      %730 = sbr.rel (0) target = $region33
    $region32: #{tpu_custom_call.1} parent=1 // pred_region
      %731 = dma.done [#allocation4], 64
    $region33: #{tpu_custom_call.1} parent=1 // pred_fallthru
      _
    %732 = vsyncpa [#allocation3], 1
    %733 = vsyncpa [#allocation6], 1
    %734 = vsyncpa [#allocation4], 1

</llo_original>
